<compile_context>
chip_gen: v7x
topology: tpu7x:2x2x1
jax: 0.10.0
libtpu: 0.0.40
codegen_flags: <defaults>
</compile_context>

<pallas_src>
import functools
import math

import jax
import jax.numpy as jnp
from jax import lax
from jax.experimental import pallas as pl
from jax.experimental.pallas import tpu as pltpu


def _round_up(x, m):
    return (x + m - 1) // m * m


# --------------------------------------------------------------------------
# Kernel 1: fused QKV projection (PyTorch (d_out, d_in) weight layout — the
# contraction is over the last dims, so no W.T is ever materialized).
# --------------------------------------------------------------------------
def _qkv_projection_kernel(x_ref, wq_ref, wk_ref, wv_ref,
                           q_ref, k_ref, v_ref, *, scale):
    x = x_ref[...]

    def _proj(w_ref):
        return lax.dot_general(
            x, w_ref[...],
            (((1,), (1,)), ((), ())),          # contract d_in with d_in
            preferred_element_type=jnp.float32)

    # 1/sqrt(d_out) folded into Q here (touches S*d_out elems, not S*S).
    q_ref[...] = (_proj(wq_ref) * scale).astype(q_ref.dtype)
    k_ref[...] = _proj(wk_ref).astype(k_ref.dtype)
    v_ref[...] = _proj(wv_ref).astype(v_ref.dtype)


# --------------------------------------------------------------------------
# Kernel 2: flash attention over precomputed (already scaled) Q and K/V tiles.
# --------------------------------------------------------------------------
def _flash_attention_kernel(q_ref, k_ref, v_ref, bias_ref, o_ref,
                            m_sc, l_sc, acc_sc, *, mm_dtype):
    kv = pl.program_id(1)

    @pl.when(kv == 0)
    def _init():
        m_sc[...] = jnp.full_like(m_sc, -jnp.inf)
        l_sc[...] = jnp.zeros_like(l_sc)
        acc_sc[...] = jnp.zeros_like(acc_sc)

    # scores = q @ k^T without materializing a transpose: contract last dims.
    s = lax.dot_general(q_ref[...], k_ref[...],
                        (((1,), (1,)), ((), ())),
                        preferred_element_type=jnp.float32)
    # Additive key-padding bias (0 for real keys, -1e30 for padded keys):
    # a single broadcast add instead of per-step iota + compare + select.
    s = s + bias_ref[...]

    # Online softmax; vector math stays f32.
    m_prev = m_sc[...]
    m_new = jnp.maximum(m_prev, jnp.max(s, axis=-1, keepdims=True))
    alpha = jnp.exp(m_prev - m_new)
    p = jnp.exp(s - m_new)
    l_sc[...] = alpha * l_sc[...] + jnp.sum(p, axis=-1, keepdims=True)
    acc_sc[...] = alpha * acc_sc[...] + jnp.dot(
        p.astype(mm_dtype), v_ref[...], preferred_element_type=jnp.float32)
    m_sc[...] = m_new

    @pl.when(kv == pl.num_programs(1) - 1)
    def _finalize():
        inv_l = pl.reciprocal(l_sc[...], approx=True)   # EUP, not VALU divide
        o_ref[...] = (acc_sc[...] * inv_l).astype(o_ref.dtype)


# --------------------------------------------------------------------------
# Wrapper
# --------------------------------------------------------------------------
def self_attention_v2(x, w_query, w_key, w_value, *,
                      block_q=256, block_k=512, use_bf16_matmul=True,
                      vmem_limit_bytes=48 * 1024 * 1024):
    """Fused single-head self-attention (SelfAttention_v2 forward).

    x                 : (S, d_in) activations.
    w_query/key/value : PyTorch nn.Linear layout, shape (d_out, d_in), no bias.
    """
    S, d_in = x.shape
    d_out = w_query.shape[0]
    out_dtype = x.dtype

    mm_dtype = jnp.bfloat16 if use_bf16_matmul else jnp.float32
    scale = 1.0 / math.sqrt(d_out)            # PyTorch: keys.shape[-1] ** 0.5

    # Lane-dense padding of the feature dims; clip blocks for small sequences
    # (keep multiples of 128 — MXU-native on every generation).
    d_in_p = _round_up(d_in, 128)
    d_out_p = _round_up(d_out, 128)
    block_q = min(block_q, _round_up(S, 128))
    block_k = min(block_k, _round_up(S, 128))

    # Tight per-axis grid extents (no fully-padded kv steps ever run).
    n_q = pl.cdiv(S, block_q)
    n_kv = pl.cdiv(S, block_k)
    s_q_p = n_q * block_q
    s_kv_p = n_kv * block_k
    # Backing length for the projected Q/K/V so both flash-kernel BlockSpecs
    # index whole blocks of the same arrays.
    s_proj = _round_up(max(s_q_p, s_kv_p), math.lcm(block_q, block_k))

    # Pre-cast x and weights once in the wrapper (halves HBM/VMEM traffic for
    # the streamed tiles and removes per-step VPU casts inside the kernels).
    xp = jnp.zeros((s_proj, d_in_p), mm_dtype).at[:S, :d_in].set(
        x.astype(mm_dtype))

    def _pad_w(w):
        return jnp.zeros((d_out_p, d_in_p), mm_dtype).at[:d_out, :d_in].set(
            w.astype(mm_dtype))

    wq, wk, wv = _pad_w(w_query), _pad_w(w_key), _pad_w(w_value)

    # --- Projection prologue (runs once over the sequence) -----------------
    # Weights use a constant index_map; for very large d_in/d_out one would
    # additionally tile the contraction, not needed at these sizes.
    q, k, v = pl.pallas_call(
        functools.partial(_qkv_projection_kernel, scale=scale),
        out_shape=(jax.ShapeDtypeStruct((s_proj, d_out_p), mm_dtype),) * 3,
        grid=(s_proj // block_q,),
        in_specs=[
            pl.BlockSpec((block_q, d_in_p), lambda i: (i, 0)),     # x rows
            pl.BlockSpec((d_out_p, d_in_p), lambda i: (0, 0)),     # W_query
            pl.BlockSpec((d_out_p, d_in_p), lambda i: (0, 0)),     # W_key
            pl.BlockSpec((d_out_p, d_in_p), lambda i: (0, 0)),     # W_value
        ],
        out_specs=(
            pl.BlockSpec((block_q, d_out_p), lambda i: (i, 0)),
            pl.BlockSpec((block_q, d_out_p), lambda i: (i, 0)),
            pl.BlockSpec((block_q, d_out_p), lambda i: (i, 0)),
        ),
        compiler_params=pltpu.CompilerParams(
            dimension_semantics=("parallel",),
            vmem_limit_bytes=vmem_limit_bytes,
        ),
    )(xp, wq, wk, wv)

    # Additive key-padding bias row: 0 for real keys, -1e30 for padded keys.
    key_pos = jnp.arange(s_kv_p, dtype=jnp.int32)
    bias = jnp.where(key_pos < S, 0.0, -1e30).astype(jnp.float32)
    bias = bias.reshape(1, s_kv_p)

    # --- Flash attention over precomputed Q/K/V ----------------------------
    out_p = pl.pallas_call(
        functools.partial(_flash_attention_kernel, mm_dtype=mm_dtype),
        out_shape=jax.ShapeDtypeStruct((s_q_p, d_out_p), out_dtype),
        grid=(n_q, n_kv),
        in_specs=[
            pl.BlockSpec((block_q, d_out_p), lambda i, j: (i, 0)),  # Q block
            pl.BlockSpec((block_k, d_out_p), lambda i, j: (j, 0)),  # K block
            pl.BlockSpec((block_k, d_out_p), lambda i, j: (j, 0)),  # V block
            pl.BlockSpec((1, block_k), lambda i, j: (0, j)),        # key bias
        ],
        out_specs=pl.BlockSpec((block_q, d_out_p), lambda i, j: (i, 0)),
        scratch_shapes=[
            pltpu.VMEM((block_q, 1), jnp.float32),        # running max m
            pltpu.VMEM((block_q, 1), jnp.float32),        # running denom l
            pltpu.VMEM((block_q, d_out_p), jnp.float32),  # output accumulator
        ],
        compiler_params=pltpu.CompilerParams(
            dimension_semantics=("parallel", "arbitrary"),
            vmem_limit_bytes=vmem_limit_bytes,
        ),
    )(q, k, v, bias)

    return out_p[:S, :d_out]


def _reference(x, w_query, w_key, w_value):
    q = x @ w_query.T
    k = x @ w_key.T
    v = x @ w_value.T
    scores = q @ k.T / jnp.sqrt(jnp.float32(k.shape[-1]))
    w = jax.nn.softmax(scores, axis=-1)
    return w @ v


if __name__ == "__main__":
    seq, d_in, d_out = 8, 16, 32

    key = jax.random.PRNGKey(0)
    kx, kq, kk, kv = jax.random.split(key, 4)

    x = jax.random.normal(kx, (seq, d_in), dtype=jnp.float32)

    # Deterministic Linear-style init: U(-1/sqrt(d_in), 1/sqrt(d_in)), (d_out, d_in)
    bound = 1.0 / (d_in ** 0.5)
    w_query = jax.random.uniform(kq, (d_out, d_in), jnp.float32, -bound, bound)
    w_key = jax.random.uniform(kk, (d_out, d_in), jnp.float32, -bound, bound)
    w_value = jax.random.uniform(kv, (d_out, d_in), jnp.float32, -bound, bound)

    ref = _reference(x, w_query, w_key, w_value)

    # f32 MXU operands (tight check).
    out_f32 = self_attention_v2(x, w_query, w_key, w_value,
                                use_bf16_matmul=False)
    out_f32 = jax.block_until_ready(out_f32)
    assert out_f32.shape == (seq, d_out)
    assert jnp.allclose(out_f32, ref, atol=5e-3, rtol=5e-3), \
        float(jnp.max(jnp.abs(out_f32 - ref)))

    # Default path: bf16 MXU operands with f32 accumulation (looser check).
    out_bf16 = self_attention_v2(x, w_query, w_key, w_value)
    out_bf16 = jax.block_until_ready(out_bf16)
    assert out_bf16.shape == (seq, d_out)
    assert jnp.allclose(out_bf16, ref, atol=5e-2, rtol=5e-2), \
        float(jnp.max(jnp.abs(out_bf16 - ref)))

    print("KERNEL_OK")
</pallas_src>

<mosaic_0001>
module attributes {stable_mosaic.version = 11 : i64} {
  func.func @_qkv_projection_kernel(%arg0: i32, %arg1: memref<128x128xf32, #tpu.memory_space<vmem>>, %arg2: memref<128x128xf32, #tpu.memory_space<vmem>>, %arg3: memref<128x128xf32, #tpu.memory_space<vmem>>, %arg4: memref<128x128xf32, #tpu.memory_space<vmem>>, %arg5: memref<128x128xf32, #tpu.memory_space<vmem>>, %arg6: memref<128x128xf32, #tpu.memory_space<vmem>>, %arg7: memref<128x128xf32, #tpu.memory_space<vmem>>) attributes {dimension_semantics = [#tpu.dimension_semantics<parallel>], iteration_bounds = array<i64: 1>, scalar_prefetch = 0 : i64, scratch_operands = 0 : i64, tpu.core_type = #tpu.core_type<tc>, window_params = [{transform_indices = @transform_0, window_bounds = array<i64: 128, 128>}, {pipeline_mode = #tpu.pipeline_mode<synchronous>, transform_indices = @transform_1, window_bounds = array<i64: 128, 128>}, {pipeline_mode = #tpu.pipeline_mode<synchronous>, transform_indices = @transform_2, window_bounds = array<i64: 128, 128>}, {pipeline_mode = #tpu.pipeline_mode<synchronous>, transform_indices = @transform_3, window_bounds = array<i64: 128, 128>}, {transform_indices = @transform_4, window_bounds = array<i64: 128, 128>}, {transform_indices = @transform_5, window_bounds = array<i64: 128, 128>}, {transform_indices = @transform_6, window_bounds = array<i64: 128, 128>}]} {
    %c0 = arith.constant 0 : index
    %c0_0 = arith.constant 0 : index
    %0 = vector.load %arg1[%c0, %c0_0] : memref<128x128xf32, #tpu.memory_space<vmem>>, vector<128x128xf32>
    %c0_1 = arith.constant 0 : index
    %c0_2 = arith.constant 0 : index
    %1 = vector.load %arg2[%c0_1, %c0_2] : memref<128x128xf32, #tpu.memory_space<vmem>>, vector<128x128xf32>
    %cst = arith.constant dense<0.000000e+00> : vector<128x128xf32>
    %2 = tpu.matmul %0, %1, %cst {dimension_numbers = #tpu.dot_dimension_numbers<[1], [1], [0], [0], [0, 0, 1, 0], [], []>} : vector<128x128xf32>, vector<128x128xf32>, vector<128x128xf32> -> vector<128x128xf32>
    %cst_3 = arith.constant 0.176776692 : f32
    %3 = vector.broadcast %cst_3 : f32 to vector<128x128xf32>
    %4 = arith.mulf %2, %3 : vector<128x128xf32>
    %c0_4 = arith.constant 0 : index
    %c0_5 = arith.constant 0 : index
    %5 = vector.load %arg5[%c0_4, %c0_5] : memref<128x128xf32, #tpu.memory_space<vmem>>, vector<128x128xf32>
    tpu.vector_store %arg5[%c0_4, %c0_5], %4 {strides = array<i32>} : memref<128x128xf32, #tpu.memory_space<vmem>>, vector<128x128xf32>,
    %c0_6 = arith.constant 0 : index
    %c0_7 = arith.constant 0 : index
    %6 = vector.load %arg3[%c0_6, %c0_7] : memref<128x128xf32, #tpu.memory_space<vmem>>, vector<128x128xf32>
    %cst_8 = arith.constant dense<0.000000e+00> : vector<128x128xf32>
    %7 = tpu.matmul %0, %6, %cst_8 {dimension_numbers = #tpu.dot_dimension_numbers<[1], [1], [0], [0], [0, 0, 1, 0], [], []>} : vector<128x128xf32>, vector<128x128xf32>, vector<128x128xf32> -> vector<128x128xf32>
    %c0_9 = arith.constant 0 : index
    %c0_10 = arith.constant 0 : index
    %8 = vector.load %arg6[%c0_9, %c0_10] : memref<128x128xf32, #tpu.memory_space<vmem>>, vector<128x128xf32>
    tpu.vector_store %arg6[%c0_9, %c0_10], %7 {strides = array<i32>} : memref<128x128xf32, #tpu.memory_space<vmem>>, vector<128x128xf32>,
    %c0_11 = arith.constant 0 : index
    %c0_12 = arith.constant 0 : index
    %9 = vector.load %arg4[%c0_11, %c0_12] : memref<128x128xf32, #tpu.memory_space<vmem>>, vector<128x128xf32>
    %cst_13 = arith.constant dense<0.000000e+00> : vector<128x128xf32>
    %10 = tpu.matmul %0, %9, %cst_13 {dimension_numbers = #tpu.dot_dimension_numbers<[1], [1], [0], [0], [0, 0, 1, 0], [], []>} : vector<128x128xf32>, vector<128x128xf32>, vector<128x128xf32> -> vector<128x128xf32>
    %c0_14 = arith.constant 0 : index
    %c0_15 = arith.constant 0 : index
    %11 = vector.load %arg7[%c0_14, %c0_15] : memref<128x128xf32, #tpu.memory_space<vmem>>, vector<128x128xf32>
    tpu.vector_store %arg7[%c0_14, %c0_15], %10 {strides = array<i32>} : memref<128x128xf32, #tpu.memory_space<vmem>>, vector<128x128xf32>,
    return
  }
  func.func @transform_0(%arg0: i32) -> (i32, i32) {
    %c0_i32 = arith.constant 0 : i32
    %c0_i32_0 = arith.constant 0 : i32
    return %arg0, %c0_i32 : i32, i32
  }
  func.func @transform_1(%arg0: i32) -> (i32, i32) {
    %c0_i32 = arith.constant 0 : i32
    %c0_i32_0 = arith.constant 0 : i32
    %c0_i32_1 = arith.constant 0 : i32
    return %c0_i32, %c0_i32_0 : i32, i32
  }
  func.func @transform_2(%arg0: i32) -> (i32, i32) {
    %c0_i32 = arith.constant 0 : i32
    %c0_i32_0 = arith.constant 0 : i32
    %c0_i32_1 = arith.constant 0 : i32
    return %c0_i32, %c0_i32_0 : i32, i32
  }
  func.func @transform_3(%arg0: i32) -> (i32, i32) {
    %c0_i32 = arith.constant 0 : i32
    %c0_i32_0 = arith.constant 0 : i32
    %c0_i32_1 = arith.constant 0 : i32
    return %c0_i32, %c0_i32_0 : i32, i32
  }
  func.func @transform_4(%arg0: i32) -> (i32, i32) {
    %c0_i32 = arith.constant 0 : i32
    %c0_i32_0 = arith.constant 0 : i32
    return %arg0, %c0_i32 : i32, i32
  }
  func.func @transform_5(%arg0: i32) -> (i32, i32) {
    %c0_i32 = arith.constant 0 : i32
    %c0_i32_0 = arith.constant 0 : i32
    return %arg0, %c0_i32 : i32, i32
  }
  func.func @transform_6(%arg0: i32) -> (i32, i32) {
    %c0_i32 = arith.constant 0 : i32
    %c0_i32_0 = arith.constant 0 : i32
    return %arg0, %c0_i32 : i32, i32
  }
}

</mosaic_0001>

<llo_original>
// kernel: tpu_custom_call.1
$region0: #{tpu_custom_call.1}
  #allocation0 [shape = 'u32[]', space=smem, size = 0x4, offset = 0x4, fixed_abs, tag = 'smem constant byte address 0x4 - core index']
  #allocation1 [shape = 'u32[144,128]{1,0:T(1,128)}', space=vmem, size = 0x12000, scoped, tag = 'internal scratch']
  %s0 = inlined_call_operand.hbm [shape: f32[128,128], index: 0, kind: input, shape index: {}]
  %s1 = inlined_call_operand.hbm [shape: f32[128,128], index: 1, kind: input, shape index: {}]
  %s2 = inlined_call_operand.hbm [shape: f32[128,128], index: 2, kind: input, shape index: {}]
  %s3 = inlined_call_operand.hbm [shape: f32[128,128], index: 3, kind: input, shape index: {}]
  %s4 = inlined_call_operand.hbm [shape: f32[128,128], index: 4, kind: output, shape index: {0}]
  %s5 = inlined_call_operand.hbm [shape: f32[128,128], index: 5, kind: output, shape index: {1}]
  %s6 = inlined_call_operand.hbm [shape: f32[128,128], index: 6, kind: output, shape index: {2}]
  %7 = xla_tuple %s4, %s5, %s6
  %s8 = sld [smem:[#allocation0]]
  $region58: #{tpu_custom_call.1} parent=0
    _
  %s10 = ssub.s32 1, %s8
  %s11 = scalar_select 0, %s10, %s8
  $region1: #{tpu_custom_call.1} parent=0
    #allocation2 [shape = 'u8[65536]{0}', space=vmem, size = 0x10000, scoped, tag = 'input window, operand 0, single buffered']
    #allocation3 [shape = 's32[1]{0}', space=sflag, size = 0x4, scoped, tag = 'scoped memory for tpu_custom_call.1']
    #allocation4 [shape = 's32[1]{0}', space=sflag, size = 0x4, scoped, tag = 'scoped memory for tpu_custom_call.1']
    #allocation5 [shape = 'u8[65536]{0}', space=vmem, size = 0x10000, scoped, tag = 'input window, operand 1, single buffered']
    #allocation6 [shape = 's32[1]{0}', space=sflag, size = 0x4, scoped, tag = 'scoped memory for tpu_custom_call.1']
    #allocation7 [shape = 'u8[65536]{0}', space=vmem, size = 0x10000, scoped, tag = 'input window, operand 2, single buffered']
    #allocation8 [shape = 'u8[65536]{0}', space=vmem, size = 0x10000, scoped, tag = 'input window, operand 3, single buffered']
    #allocation9 [shape = 's32[1]{0}', space=sflag, size = 0x4, scoped, tag = 'scoped memory for tpu_custom_call.1']
    #allocation10 [shape = 'u8[65536]{0}', space=vmem, size = 0x10000, scoped, tag = 'output window, operand 0, single buffered']
    #allocation11 [shape = 'u8[65536]{0}', space=vmem, size = 0x10000, scoped, tag = 'output window, operand 1, single buffered']
    #allocation12 [shape = 's32[1]{0}', space=sflag, size = 0x4, scoped, tag = 'scoped memory for tpu_custom_call.1']
    #allocation13 [shape = 'u8[65536]{0}', space=vmem, size = 0x10000, scoped, tag = 'output window, operand 2, single buffered']
    %12 = vsyncpa [#allocation3], 0
    %13 = vsyncpa [#allocation6], 0
    %14 = vsyncpa [#allocation9], 0
    %15 = vsyncpa [#allocation4], 0
    %16 = vsyncpa [#allocation12], 0
    // Predicated region
    $region2: #{tpu_custom_call.1} parent=1 // pred_check
      _
    $region3: #{tpu_custom_call.1} parent=1 // pred_check_branch
      %18 = sbr.rel (0) target = $region5
    $region4: #{tpu_custom_call.1} parent=1 // pred_region
      %s20 = ssub.s32 2048, 2048
      %21 = vsyncadd [#allocation3], %s20
      %s22 = sshll.u32 [#allocation2], 4
      %s23 = int_to_ptr.vmem [resolvable:$true] %s22
      %28 = dma.hbm_to_vmem [thread:$0]  %s0, 2048, %s23, [#allocation3], 128, 128, 8
    $region5: #{tpu_custom_call.1} parent=1 // pred_fallthru
      _
    // Predicated region
    $region6: #{tpu_custom_call.1} parent=1 // pred_check
      _
    $region7: #{tpu_custom_call.1} parent=1 // pred_check_branch
      %30 = sbr.rel (0) target = $region9
    $region8: #{tpu_custom_call.1} parent=1 // pred_region
      %s32 = ssub.s32 2048, 2048
      %33 = vsyncadd [#allocation6], %s32
      %s34 = sshll.u32 [#allocation5], 4
      %s35 = int_to_ptr.vmem [resolvable:$true] %s34
      %40 = dma.hbm_to_vmem [thread:$0]  %s1, 2048, %s35, [#allocation6], 128, 128, 8
    $region9: #{tpu_custom_call.1} parent=1 // pred_fallthru
      _
    // Predicated region
    $region10: #{tpu_custom_call.1} parent=1 // pred_check
      _
    $region11: #{tpu_custom_call.1} parent=1 // pred_check_branch
      %42 = sbr.rel (0) target = $region13
    $region12: #{tpu_custom_call.1} parent=1 // pred_region
      %s44 = ssub.s32 2048, 2048
      %45 = vsyncadd [#allocation6], %s44
      %s46 = sshll.u32 [#allocation7], 4
      %s47 = int_to_ptr.vmem [resolvable:$true] %s46
      %52 = dma.hbm_to_vmem [thread:$0]  %s2, 2048, %s47, [#allocation6], 128, 128, 8
    $region13: #{tpu_custom_call.1} parent=1 // pred_fallthru
      _
    // Predicated region
    $region14: #{tpu_custom_call.1} parent=1 // pred_check
      _
    $region15: #{tpu_custom_call.1} parent=1 // pred_check_branch
      %54 = sbr.rel (0) target = $region17
    $region16: #{tpu_custom_call.1} parent=1 // pred_region
      %s56 = ssub.s32 2048, 2048
      %57 = vsyncadd [#allocation9], %s56
      %s58 = sshll.u32 [#allocation8], 4
      %s59 = int_to_ptr.vmem [resolvable:$true] %s58
      %64 = dma.hbm_to_vmem [thread:$0]  %s3, 2048, %s59, [#allocation9], 128, 128, 8
    $region17: #{tpu_custom_call.1} parent=1 // pred_fallthru
      _
    // Predicated region
    $region18: #{tpu_custom_call.1} parent=1 // pred_check
      _
    $region19: #{tpu_custom_call.1} parent=1 // pred_check_branch
      %66 = sbr.rel (0) target = $region21
    $region20: #{tpu_custom_call.1} parent=1 // pred_region
      %67 = dma.done [#allocation3], 2048
    $region21: #{tpu_custom_call.1} parent=1 // pred_fallthru
      _
    // Predicated region
    $region22: #{tpu_custom_call.1} parent=1 // pred_check
      _
    $region23: #{tpu_custom_call.1} parent=1 // pred_check_branch
      %69 = sbr.rel (0) target = $region25
    $region24: #{tpu_custom_call.1} parent=1 // pred_region
      %70 = dma.done [#allocation6], 2048
    $region25: #{tpu_custom_call.1} parent=1 // pred_fallthru
      _
    // Predicated region
    $region26: #{tpu_custom_call.1} parent=1 // pred_check
      _
    $region27: #{tpu_custom_call.1} parent=1 // pred_check_branch
      %72 = sbr.rel (0) target = $region29
    $region28: #{tpu_custom_call.1} parent=1 // pred_region
      %73 = dma.done [#allocation6], 2048
    $region29: #{tpu_custom_call.1} parent=1 // pred_fallthru
      _
    // Predicated region
    $region30: #{tpu_custom_call.1} parent=1 // pred_check
      _
    $region31: #{tpu_custom_call.1} parent=1 // pred_check_branch
      %75 = sbr.rel (0) target = $region33
    $region32: #{tpu_custom_call.1} parent=1 // pred_region
      %76 = dma.done [#allocation9], 2048
    $region33: #{tpu_custom_call.1} parent=1 // pred_fallthru
      _
    %v77 = vld [vmem:[#allocation2] sm:$0xff]
    %v78 = vld [vmem:[#allocation2 + $0x8] sm:$0xff]
    %v79 = vld [vmem:[#allocation2 + $0x10] sm:$0xff]
    %v80 = vld [vmem:[#allocation2 + $0x18] sm:$0xff]
    %v81 = vld [vmem:[#allocation2 + $0x20] sm:$0xff]
    %v82 = vld [vmem:[#allocation2 + $0x28] sm:$0xff]
    %v83 = vld [vmem:[#allocation2 + $0x30] sm:$0xff]
    %v84 = vld [vmem:[#allocation2 + $0x38] sm:$0xff]
    %v85 = vld [vmem:[#allocation2 + $0x40] sm:$0xff]
    %v86 = vld [vmem:[#allocation2 + $0x48] sm:$0xff]
    %v87 = vld [vmem:[#allocation2 + $0x50] sm:$0xff]
    %v88 = vld [vmem:[#allocation2 + $0x58] sm:$0xff]
    %v89 = vld [vmem:[#allocation2 + $0x60] sm:$0xff]
    %v90 = vld [vmem:[#allocation2 + $0x68] sm:$0xff]
    %v91 = vld [vmem:[#allocation2 + $0x70] sm:$0xff]
    %v92 = vld [vmem:[#allocation2 + $0x78] sm:$0xff]
    %v93 = vld [vmem:[#allocation5] sm:$0xff]
    %v94 = vld [vmem:[#allocation5 + $0x8] sm:$0xff]
    %v95 = vld [vmem:[#allocation5 + $0x10] sm:$0xff]
    %v96 = vld [vmem:[#allocation5 + $0x18] sm:$0xff]
    %v97 = vld [vmem:[#allocation5 + $0x20] sm:$0xff]
    %v98 = vld [vmem:[#allocation5 + $0x28] sm:$0xff]
    %v99 = vld [vmem:[#allocation5 + $0x30] sm:$0xff]
    %v100 = vld [vmem:[#allocation5 + $0x38] sm:$0xff]
    %v101 = vld [vmem:[#allocation5 + $0x40] sm:$0xff]
    %v102 = vld [vmem:[#allocation5 + $0x48] sm:$0xff]
    %v103 = vld [vmem:[#allocation5 + $0x50] sm:$0xff]
    %v104 = vld [vmem:[#allocation5 + $0x58] sm:$0xff]
    %v105 = vld [vmem:[#allocation5 + $0x60] sm:$0xff]
    %v106 = vld [vmem:[#allocation5 + $0x68] sm:$0xff]
    %v107 = vld [vmem:[#allocation5 + $0x70] sm:$0xff]
    %v108 = vld [vmem:[#allocation5 + $0x78] sm:$0xff]
    %109 = vmatprep.subr.mxu0 0.0
    %110 = vmatpush1.xpose.msra.mxu0 %v93
    %111 = vmatprep.subr.mxu0 0.0
    %112 = vmatpush1.xpose.msra.mxu0 %v94
    %113 = vmatprep.subr.mxu0 0.0
    %114 = vmatpush1.xpose.msra.mxu0 %v95
    %115 = vmatprep.subr.mxu0 0.0
    %116 = vmatpush1.xpose.msra.mxu0 %v96
    %117 = vmatprep.subr.mxu0 0.0
    %118 = vmatpush1.xpose.msra.mxu0 %v97
    %119 = vmatprep.subr.mxu0 0.0
    %120 = vmatpush1.xpose.msra.mxu0 %v98
    %121 = vmatprep.subr.mxu0 0.0
    %122 = vmatpush1.xpose.msra.mxu0 %v99
    %123 = vmatprep.subr.mxu0 0.0
    %124 = vmatpush1.xpose.msra.mxu0 %v100
    %125 = vmatprep.subr.mxu0 0.0
    %126 = vmatpush1.xpose.msra.mxu0 %v101
    %127 = vmatprep.subr.mxu0 0.0
    %128 = vmatpush1.xpose.msra.mxu0 %v102
    %129 = vmatprep.subr.mxu0 0.0
    %130 = vmatpush1.xpose.msra.mxu0 %v103
    %131 = vmatprep.subr.mxu0 0.0
    %132 = vmatpush1.xpose.msra.mxu0 %v104
    %133 = vmatprep.subr.mxu0 0.0
    %134 = vmatpush1.xpose.msra.mxu0 %v105
    %135 = vmatprep.subr.mxu0 0.0
    %136 = vmatpush1.xpose.msra.mxu0 %v106
    %137 = vmatprep.subr.mxu0 0.0
    %138 = vmatpush1.xpose.msra.mxu0 %v107
    %139 = vmatprep.subr.mxu0 0.0
    %140 = vmatpush1.xpose.msra.mxu0 %v108
    %141 = vmatprep.subr.mxu0 0.0
    %142 = vmatpush1.xpose.msra.mxu0 0.0
    %143 = vmatprep.subr.mxu0 0.0
    %144 = vmatpush1.xpose.msra.mxu0 0.0
    %145 = vmatprep.subr.mxu0 0.0
    %146 = vmatpush1.xpose.msra.mxu0 0.0
    %147 = vmatprep.subr.mxu0 0.0
    %148 = vmatpush1.xpose.msra.mxu0 0.0
    %149 = vmatprep.subr.mxu0 0.0
    %150 = vmatpush1.xpose.msra.mxu0 0.0
    %151 = vmatprep.subr.mxu0 0.0
    %152 = vmatpush1.xpose.msra.mxu0 0.0
    %153 = vmatprep.subr.mxu0 0.0
    %154 = vmatpush1.xpose.msra.mxu0 0.0
    %155 = vmatprep.subr.mxu0 0.0
    %156 = vmatpush1.xpose.msra.mxu0 0.0
    %157 = vmatprep.subr.mxu0 0.0
    %158 = vmatpush1.xpose.msra.mxu0 0.0
    %159 = vmatprep.subr.mxu0 0.0
    %160 = vmatpush1.xpose.msra.mxu0 0.0
    %161 = vmatprep.subr.mxu0 0.0
    %162 = vmatpush1.xpose.msra.mxu0 0.0
    %163 = vmatprep.subr.mxu0 0.0
    %164 = vmatpush1.xpose.msra.mxu0 0.0
    %165 = vmatprep.subr.mxu0 0.0
    %166 = vmatpush1.xpose.msra.mxu0 0.0
    %167 = vmatprep.subr.mxu0 0.0
    %168 = vmatpush1.xpose.msra.mxu0 0.0
    %169 = vmatprep.subr.mxu0 0.0
    %170 = vmatpush1.xpose.msra.mxu0 0.0
    %171 = vmatprep.subr.mxu0 0.0
    %172 = vmatpush1.xpose.msra.mxu0 0.0
    %173 = vmatprep.mubr.f32.mxu0 0.0
    %174 = vmatmul.mubr.f32.gmra.mrb[0].mxu0 %v77
    %v175 = vpop.f32.mrb[0].mxu0
    %v176 = vadd.f32 0.0, %v175
    %v177 = vpop.f32.mrb[0].mxu0
    %178 = vmatprep.mubr.f32.mxu0 0.0
    %179 = vmatmul.mubr.f32.gmra.mrb[0].mxu0 %v78
    %v180 = vpop.f32.mrb[0].mxu0
    %v181 = vadd.f32 0.0, %v180
    %v182 = vpop.f32.mrb[0].mxu0
    %183 = vmatprep.mubr.f32.mxu0 0.0
    %184 = vmatmul.mubr.f32.gmra.mrb[0].mxu0 %v79
    %v185 = vpop.f32.mrb[0].mxu0
    %v186 = vadd.f32 0.0, %v185
    %v187 = vpop.f32.mrb[0].mxu0
    %188 = vmatprep.mubr.f32.mxu0 0.0
    %189 = vmatmul.mubr.f32.gmra.mrb[0].mxu0 %v80
    %v190 = vpop.f32.mrb[0].mxu0
    %v191 = vadd.f32 0.0, %v190
    %v192 = vpop.f32.mrb[0].mxu0
    %193 = vmatprep.mubr.f32.mxu0 0.0
    %194 = vmatmul.mubr.f32.gmra.mrb[0].mxu0 %v81
    %v195 = vpop.f32.mrb[0].mxu0
    %v196 = vadd.f32 0.0, %v195
    %v197 = vpop.f32.mrb[0].mxu0
    %198 = vmatprep.mubr.f32.mxu0 0.0
    %199 = vmatmul.mubr.f32.gmra.mrb[0].mxu0 %v82
    %v200 = vpop.f32.mrb[0].mxu0
    %v201 = vadd.f32 0.0, %v200
    %v202 = vpop.f32.mrb[0].mxu0
    %203 = vmatprep.mubr.f32.mxu0 0.0
    %204 = vmatmul.mubr.f32.gmra.mrb[0].mxu0 %v83
    %v205 = vpop.f32.mrb[0].mxu0
    %v206 = vadd.f32 0.0, %v205
    %v207 = vpop.f32.mrb[0].mxu0
    %208 = vmatprep.mubr.f32.mxu0 0.0
    %209 = vmatmul.mubr.f32.gmra.mrb[0].mxu0 %v84
    %v210 = vpop.f32.mrb[0].mxu0
    %v211 = vadd.f32 0.0, %v210
    %v212 = vpop.f32.mrb[0].mxu0
    %213 = vmatprep.mubr.f32.mxu0 0.0
    %214 = vmatmul.mubr.f32.gmra.mrb[0].mxu0 %v85
    %v215 = vpop.f32.mrb[0].mxu0
    %v216 = vadd.f32 0.0, %v215
    %v217 = vpop.f32.mrb[0].mxu0
    %218 = vmatprep.mubr.f32.mxu0 0.0
    %219 = vmatmul.mubr.f32.gmra.mrb[0].mxu0 %v86
    %v220 = vpop.f32.mrb[0].mxu0
    %v221 = vadd.f32 0.0, %v220
    %v222 = vpop.f32.mrb[0].mxu0
    %223 = vmatprep.mubr.f32.mxu0 0.0
    %224 = vmatmul.mubr.f32.gmra.mrb[0].mxu0 %v87
    %v225 = vpop.f32.mrb[0].mxu0
    %v226 = vadd.f32 0.0, %v225
    %v227 = vpop.f32.mrb[0].mxu0
    %228 = vmatprep.mubr.f32.mxu0 0.0
    %229 = vmatmul.mubr.f32.gmra.mrb[0].mxu0 %v88
    %v230 = vpop.f32.mrb[0].mxu0
    %v231 = vadd.f32 0.0, %v230
    %v232 = vpop.f32.mrb[0].mxu0
    %233 = vmatprep.mubr.f32.mxu0 0.0
    %234 = vmatmul.mubr.f32.gmra.mrb[0].mxu0 %v89
    %v235 = vpop.f32.mrb[0].mxu0
    %v236 = vadd.f32 0.0, %v235
    %v237 = vpop.f32.mrb[0].mxu0
    %238 = vmatprep.mubr.f32.mxu0 0.0
    %239 = vmatmul.mubr.f32.gmra.mrb[0].mxu0 %v90
    %v240 = vpop.f32.mrb[0].mxu0
    %v241 = vadd.f32 0.0, %v240
    %v242 = vpop.f32.mrb[0].mxu0
    %243 = vmatprep.mubr.f32.mxu0 0.0
    %244 = vmatmul.mubr.f32.gmra.mrb[0].mxu0 %v91
    %v245 = vpop.f32.mrb[0].mxu0
    %v246 = vadd.f32 0.0, %v245
    %v247 = vpop.f32.mrb[0].mxu0
    %248 = vmatprep.mubr.f32.mxu0 0.0
    %249 = vmatmul.mubr.f32.gmra.mrb[0].mxu0 %v92
    %v250 = vpop.f32.mrb[0].mxu0
    %v251 = vadd.f32 0.0, %v250
    %v252 = vpop.f32.mrb[0].mxu0
    %253 = vdwg.mxu0
    %v254 = vmul.f32 %v176, 0.17677669
    %v255 = vmul.f32 %v181, 0.17677669
    %v256 = vmul.f32 %v186, 0.17677669
    %v257 = vmul.f32 %v191, 0.17677669
    %v258 = vmul.f32 %v196, 0.17677669
    %v259 = vmul.f32 %v201, 0.17677669
    %v260 = vmul.f32 %v206, 0.17677669
    %v261 = vmul.f32 %v211, 0.17677669
    %v262 = vmul.f32 %v216, 0.17677669
    %v263 = vmul.f32 %v221, 0.17677669
    %v264 = vmul.f32 %v226, 0.17677669
    %v265 = vmul.f32 %v231, 0.17677669
    %v266 = vmul.f32 %v236, 0.17677669
    %v267 = vmul.f32 %v241, 0.17677669
    %v268 = vmul.f32 %v246, 0.17677669
    %v269 = vmul.f32 %v251, 0.17677669
    %270 = vst [vmem:[#allocation10] sm:$0xff] %v254
    %271 = vst [vmem:[#allocation10 + $0x8] sm:$0xff] %v255
    %272 = vst [vmem:[#allocation10 + $0x10] sm:$0xff] %v256
    %273 = vst [vmem:[#allocation10 + $0x18] sm:$0xff] %v257
    %274 = vst [vmem:[#allocation10 + $0x20] sm:$0xff] %v258
    %275 = vst [vmem:[#allocation10 + $0x28] sm:$0xff] %v259
    %276 = vst [vmem:[#allocation10 + $0x30] sm:$0xff] %v260
    %277 = vst [vmem:[#allocation10 + $0x38] sm:$0xff] %v261
    %278 = vst [vmem:[#allocation10 + $0x40] sm:$0xff] %v262
    %279 = vst [vmem:[#allocation10 + $0x48] sm:$0xff] %v263
    %280 = vst [vmem:[#allocation10 + $0x50] sm:$0xff] %v264
    %281 = vst [vmem:[#allocation10 + $0x58] sm:$0xff] %v265
    %282 = vst [vmem:[#allocation10 + $0x60] sm:$0xff] %v266
    %283 = vst [vmem:[#allocation10 + $0x68] sm:$0xff] %v267
    %284 = vst [vmem:[#allocation10 + $0x70] sm:$0xff] %v268
    %285 = vst [vmem:[#allocation10 + $0x78] sm:$0xff] %v269
    %v286 = vld [vmem:[#allocation7] sm:$0xff]
    %v287 = vld [vmem:[#allocation7 + $0x8] sm:$0xff]
    %v288 = vld [vmem:[#allocation7 + $0x10] sm:$0xff]
    %v289 = vld [vmem:[#allocation7 + $0x18] sm:$0xff]
    %v290 = vld [vmem:[#allocation7 + $0x20] sm:$0xff]
    %v291 = vld [vmem:[#allocation7 + $0x28] sm:$0xff]
    %v292 = vld [vmem:[#allocation7 + $0x30] sm:$0xff]
    %v293 = vld [vmem:[#allocation7 + $0x38] sm:$0xff]
    %v294 = vld [vmem:[#allocation7 + $0x40] sm:$0xff]
    %v295 = vld [vmem:[#allocation7 + $0x48] sm:$0xff]
    %v296 = vld [vmem:[#allocation7 + $0x50] sm:$0xff]
    %v297 = vld [vmem:[#allocation7 + $0x58] sm:$0xff]
    %v298 = vld [vmem:[#allocation7 + $0x60] sm:$0xff]
    %v299 = vld [vmem:[#allocation7 + $0x68] sm:$0xff]
    %v300 = vld [vmem:[#allocation7 + $0x70] sm:$0xff]
    %v301 = vld [vmem:[#allocation7 + $0x78] sm:$0xff]
    %302 = vmatprep.subr.mxu0 0.0
    %303 = vmatpush1.xpose.msra.mxu0 %v286
    %304 = vmatprep.subr.mxu0 0.0
    %305 = vmatpush1.xpose.msra.mxu0 %v287
    %306 = vmatprep.subr.mxu0 0.0
    %307 = vmatpush1.xpose.msra.mxu0 %v288
    %308 = vmatprep.subr.mxu0 0.0
    %309 = vmatpush1.xpose.msra.mxu0 %v289
    %310 = vmatprep.subr.mxu0 0.0
    %311 = vmatpush1.xpose.msra.mxu0 %v290
    %312 = vmatprep.subr.mxu0 0.0
    %313 = vmatpush1.xpose.msra.mxu0 %v291
    %314 = vmatprep.subr.mxu0 0.0
    %315 = vmatpush1.xpose.msra.mxu0 %v292
    %316 = vmatprep.subr.mxu0 0.0
    %317 = vmatpush1.xpose.msra.mxu0 %v293
    %318 = vmatprep.subr.mxu0 0.0
    %319 = vmatpush1.xpose.msra.mxu0 %v294
    %320 = vmatprep.subr.mxu0 0.0
    %321 = vmatpush1.xpose.msra.mxu0 %v295
    %322 = vmatprep.subr.mxu0 0.0
    %323 = vmatpush1.xpose.msra.mxu0 %v296
    %324 = vmatprep.subr.mxu0 0.0
    %325 = vmatpush1.xpose.msra.mxu0 %v297
    %326 = vmatprep.subr.mxu0 0.0
    %327 = vmatpush1.xpose.msra.mxu0 %v298
    %328 = vmatprep.subr.mxu0 0.0
    %329 = vmatpush1.xpose.msra.mxu0 %v299
    %330 = vmatprep.subr.mxu0 0.0
    %331 = vmatpush1.xpose.msra.mxu0 %v300
    %332 = vmatprep.subr.mxu0 0.0
    %333 = vmatpush1.xpose.msra.mxu0 %v301
    %334 = vmatprep.subr.mxu0 0.0
    %335 = vmatpush1.xpose.msra.mxu0 0.0
    %336 = vmatprep.subr.mxu0 0.0
    %337 = vmatpush1.xpose.msra.mxu0 0.0
    %338 = vmatprep.subr.mxu0 0.0
    %339 = vmatpush1.xpose.msra.mxu0 0.0
    %340 = vmatprep.subr.mxu0 0.0
    %341 = vmatpush1.xpose.msra.mxu0 0.0
    %342 = vmatprep.subr.mxu0 0.0
    %343 = vmatpush1.xpose.msra.mxu0 0.0
    %344 = vmatprep.subr.mxu0 0.0
    %345 = vmatpush1.xpose.msra.mxu0 0.0
    %346 = vmatprep.subr.mxu0 0.0
    %347 = vmatpush1.xpose.msra.mxu0 0.0
    %348 = vmatprep.subr.mxu0 0.0
    %349 = vmatpush1.xpose.msra.mxu0 0.0
    %350 = vmatprep.subr.mxu0 0.0
    %351 = vmatpush1.xpose.msra.mxu0 0.0
    %352 = vmatprep.subr.mxu0 0.0
    %353 = vmatpush1.xpose.msra.mxu0 0.0
    %354 = vmatprep.subr.mxu0 0.0
    %355 = vmatpush1.xpose.msra.mxu0 0.0
    %356 = vmatprep.subr.mxu0 0.0
    %357 = vmatpush1.xpose.msra.mxu0 0.0
    %358 = vmatprep.subr.mxu0 0.0
    %359 = vmatpush1.xpose.msra.mxu0 0.0
    %360 = vmatprep.subr.mxu0 0.0
    %361 = vmatpush1.xpose.msra.mxu0 0.0
    %362 = vmatprep.subr.mxu0 0.0
    %363 = vmatpush1.xpose.msra.mxu0 0.0
    %364 = vmatprep.subr.mxu0 0.0
    %365 = vmatpush1.xpose.msra.mxu0 0.0
    %366 = vmatprep.mubr.f32.mxu0 0.0
    %367 = vmatmul.mubr.f32.gmra.mrb[0].mxu0 %v77
    %v368 = vpop.f32.mrb[0].mxu0
    %v369 = vadd.f32 0.0, %v368
    %v370 = vpop.f32.mrb[0].mxu0
    %371 = vmatprep.mubr.f32.mxu0 0.0
    %372 = vmatmul.mubr.f32.gmra.mrb[0].mxu0 %v78
    %v373 = vpop.f32.mrb[0].mxu0
    %v374 = vadd.f32 0.0, %v373
    %v375 = vpop.f32.mrb[0].mxu0
    %376 = vmatprep.mubr.f32.mxu0 0.0
    %377 = vmatmul.mubr.f32.gmra.mrb[0].mxu0 %v79
    %v378 = vpop.f32.mrb[0].mxu0
    %v379 = vadd.f32 0.0, %v378
    %v380 = vpop.f32.mrb[0].mxu0
    %381 = vmatprep.mubr.f32.mxu0 0.0
    %382 = vmatmul.mubr.f32.gmra.mrb[0].mxu0 %v80
    %v383 = vpop.f32.mrb[0].mxu0
    %v384 = vadd.f32 0.0, %v383
    %v385 = vpop.f32.mrb[0].mxu0
    %386 = vmatprep.mubr.f32.mxu0 0.0
    %387 = vmatmul.mubr.f32.gmra.mrb[0].mxu0 %v81
    %v388 = vpop.f32.mrb[0].mxu0
    %v389 = vadd.f32 0.0, %v388
    %v390 = vpop.f32.mrb[0].mxu0
    %391 = vmatprep.mubr.f32.mxu0 0.0
    %392 = vmatmul.mubr.f32.gmra.mrb[0].mxu0 %v82
    %v393 = vpop.f32.mrb[0].mxu0
    %v394 = vadd.f32 0.0, %v393
    %v395 = vpop.f32.mrb[0].mxu0
    %396 = vmatprep.mubr.f32.mxu0 0.0
    %397 = vmatmul.mubr.f32.gmra.mrb[0].mxu0 %v83
    %v398 = vpop.f32.mrb[0].mxu0
    %v399 = vadd.f32 0.0, %v398
    %v400 = vpop.f32.mrb[0].mxu0
    %401 = vmatprep.mubr.f32.mxu0 0.0
    %402 = vmatmul.mubr.f32.gmra.mrb[0].mxu0 %v84
    %v403 = vpop.f32.mrb[0].mxu0
    %v404 = vadd.f32 0.0, %v403
    %v405 = vpop.f32.mrb[0].mxu0
    %406 = vmatprep.mubr.f32.mxu0 0.0
    %407 = vmatmul.mubr.f32.gmra.mrb[0].mxu0 %v85
    %v408 = vpop.f32.mrb[0].mxu0
    %v409 = vadd.f32 0.0, %v408
    %v410 = vpop.f32.mrb[0].mxu0
    %411 = vmatprep.mubr.f32.mxu0 0.0
    %412 = vmatmul.mubr.f32.gmra.mrb[0].mxu0 %v86
    %v413 = vpop.f32.mrb[0].mxu0
    %v414 = vadd.f32 0.0, %v413
    %v415 = vpop.f32.mrb[0].mxu0
    %416 = vmatprep.mubr.f32.mxu0 0.0
    %417 = vmatmul.mubr.f32.gmra.mrb[0].mxu0 %v87
    %v418 = vpop.f32.mrb[0].mxu0
    %v419 = vadd.f32 0.0, %v418
    %v420 = vpop.f32.mrb[0].mxu0
    %421 = vmatprep.mubr.f32.mxu0 0.0
    %422 = vmatmul.mubr.f32.gmra.mrb[0].mxu0 %v88
    %v423 = vpop.f32.mrb[0].mxu0
    %v424 = vadd.f32 0.0, %v423
    %v425 = vpop.f32.mrb[0].mxu0
    %426 = vmatprep.mubr.f32.mxu0 0.0
    %427 = vmatmul.mubr.f32.gmra.mrb[0].mxu0 %v89
    %v428 = vpop.f32.mrb[0].mxu0
    %v429 = vadd.f32 0.0, %v428
    %v430 = vpop.f32.mrb[0].mxu0
    %431 = vmatprep.mubr.f32.mxu0 0.0
    %432 = vmatmul.mubr.f32.gmra.mrb[0].mxu0 %v90
    %v433 = vpop.f32.mrb[0].mxu0
    %v434 = vadd.f32 0.0, %v433
    %v435 = vpop.f32.mrb[0].mxu0
    %436 = vmatprep.mubr.f32.mxu0 0.0
    %437 = vmatmul.mubr.f32.gmra.mrb[0].mxu0 %v91
    %v438 = vpop.f32.mrb[0].mxu0
    %v439 = vadd.f32 0.0, %v438
    %v440 = vpop.f32.mrb[0].mxu0
    %441 = vmatprep.mubr.f32.mxu0 0.0
    %442 = vmatmul.mubr.f32.gmra.mrb[0].mxu0 %v92
    %v443 = vpop.f32.mrb[0].mxu0
    %v444 = vadd.f32 0.0, %v443
    %v445 = vpop.f32.mrb[0].mxu0
    %446 = vdwg.mxu0
    %447 = vst [vmem:[#allocation11] sm:$0xff] %v369
    %448 = vst [vmem:[#allocation11 + $0x8] sm:$0xff] %v374
    %449 = vst [vmem:[#allocation11 + $0x10] sm:$0xff] %v379
    %450 = vst [vmem:[#allocation11 + $0x18] sm:$0xff] %v384
    %451 = vst [vmem:[#allocation11 + $0x20] sm:$0xff] %v389
    %452 = vst [vmem:[#allocation11 + $0x28] sm:$0xff] %v394
    %453 = vst [vmem:[#allocation11 + $0x30] sm:$0xff] %v399
    %454 = vst [vmem:[#allocation11 + $0x38] sm:$0xff] %v404
    %455 = vst [vmem:[#allocation11 + $0x40] sm:$0xff] %v409
    %456 = vst [vmem:[#allocation11 + $0x48] sm:$0xff] %v414
    %457 = vst [vmem:[#allocation11 + $0x50] sm:$0xff] %v419
    %458 = vst [vmem:[#allocation11 + $0x58] sm:$0xff] %v424
    %459 = vst [vmem:[#allocation11 + $0x60] sm:$0xff] %v429
    %460 = vst [vmem:[#allocation11 + $0x68] sm:$0xff] %v434
    %461 = vst [vmem:[#allocation11 + $0x70] sm:$0xff] %v439
    %462 = vst [vmem:[#allocation11 + $0x78] sm:$0xff] %v444
    %v463 = vld [vmem:[#allocation8] sm:$0xff]
    %v464 = vld [vmem:[#allocation8 + $0x8] sm:$0xff]
    %v465 = vld [vmem:[#allocation8 + $0x10] sm:$0xff]
    %v466 = vld [vmem:[#allocation8 + $0x18] sm:$0xff]
    %v467 = vld [vmem:[#allocation8 + $0x20] sm:$0xff]
    %v468 = vld [vmem:[#allocation8 + $0x28] sm:$0xff]
    %v469 = vld [vmem:[#allocation8 + $0x30] sm:$0xff]
    %v470 = vld [vmem:[#allocation8 + $0x38] sm:$0xff]
    %v471 = vld [vmem:[#allocation8 + $0x40] sm:$0xff]
    %v472 = vld [vmem:[#allocation8 + $0x48] sm:$0xff]
    %v473 = vld [vmem:[#allocation8 + $0x50] sm:$0xff]
    %v474 = vld [vmem:[#allocation8 + $0x58] sm:$0xff]
    %v475 = vld [vmem:[#allocation8 + $0x60] sm:$0xff]
    %v476 = vld [vmem:[#allocation8 + $0x68] sm:$0xff]
    %v477 = vld [vmem:[#allocation8 + $0x70] sm:$0xff]
    %v478 = vld [vmem:[#allocation8 + $0x78] sm:$0xff]
    %479 = vmatprep.subr.mxu0 0.0
    %480 = vmatpush1.xpose.msra.mxu0 %v463
    %481 = vmatprep.subr.mxu0 0.0
    %482 = vmatpush1.xpose.msra.mxu0 %v464
    %483 = vmatprep.subr.mxu0 0.0
    %484 = vmatpush1.xpose.msra.mxu0 %v465
    %485 = vmatprep.subr.mxu0 0.0
    %486 = vmatpush1.xpose.msra.mxu0 %v466
    %487 = vmatprep.subr.mxu0 0.0
    %488 = vmatpush1.xpose.msra.mxu0 %v467
    %489 = vmatprep.subr.mxu0 0.0
    %490 = vmatpush1.xpose.msra.mxu0 %v468
    %491 = vmatprep.subr.mxu0 0.0
    %492 = vmatpush1.xpose.msra.mxu0 %v469
    %493 = vmatprep.subr.mxu0 0.0
    %494 = vmatpush1.xpose.msra.mxu0 %v470
    %495 = vmatprep.subr.mxu0 0.0
    %496 = vmatpush1.xpose.msra.mxu0 %v471
    %497 = vmatprep.subr.mxu0 0.0
    %498 = vmatpush1.xpose.msra.mxu0 %v472
    %499 = vmatprep.subr.mxu0 0.0
    %500 = vmatpush1.xpose.msra.mxu0 %v473
    %501 = vmatprep.subr.mxu0 0.0
    %502 = vmatpush1.xpose.msra.mxu0 %v474
    %503 = vmatprep.subr.mxu0 0.0
    %504 = vmatpush1.xpose.msra.mxu0 %v475
    %505 = vmatprep.subr.mxu0 0.0
    %506 = vmatpush1.xpose.msra.mxu0 %v476
    %507 = vmatprep.subr.mxu0 0.0
    %508 = vmatpush1.xpose.msra.mxu0 %v477
    %509 = vmatprep.subr.mxu0 0.0
    %510 = vmatpush1.xpose.msra.mxu0 %v478
    %511 = vmatprep.subr.mxu0 0.0
    %512 = vmatpush1.xpose.msra.mxu0 0.0
    %513 = vmatprep.subr.mxu0 0.0
    %514 = vmatpush1.xpose.msra.mxu0 0.0
    %515 = vmatprep.subr.mxu0 0.0
    %516 = vmatpush1.xpose.msra.mxu0 0.0
    %517 = vmatprep.subr.mxu0 0.0
    %518 = vmatpush1.xpose.msra.mxu0 0.0
    %519 = vmatprep.subr.mxu0 0.0
    %520 = vmatpush1.xpose.msra.mxu0 0.0
    %521 = vmatprep.subr.mxu0 0.0
    %522 = vmatpush1.xpose.msra.mxu0 0.0
    %523 = vmatprep.subr.mxu0 0.0
    %524 = vmatpush1.xpose.msra.mxu0 0.0
    %525 = vmatprep.subr.mxu0 0.0
    %526 = vmatpush1.xpose.msra.mxu0 0.0
    %527 = vmatprep.subr.mxu0 0.0
    %528 = vmatpush1.xpose.msra.mxu0 0.0
    %529 = vmatprep.subr.mxu0 0.0
    %530 = vmatpush1.xpose.msra.mxu0 0.0
    %531 = vmatprep.subr.mxu0 0.0
    %532 = vmatpush1.xpose.msra.mxu0 0.0
    %533 = vmatprep.subr.mxu0 0.0
    %534 = vmatpush1.xpose.msra.mxu0 0.0
    %535 = vmatprep.subr.mxu0 0.0
    %536 = vmatpush1.xpose.msra.mxu0 0.0
    %537 = vmatprep.subr.mxu0 0.0
    %538 = vmatpush1.xpose.msra.mxu0 0.0
    %539 = vmatprep.subr.mxu0 0.0
    %540 = vmatpush1.xpose.msra.mxu0 0.0
    %541 = vmatprep.subr.mxu0 0.0
    %542 = vmatpush1.xpose.msra.mxu0 0.0
    %543 = vmatprep.mubr.f32.mxu0 0.0
    %544 = vmatmul.mubr.f32.gmra.mrb[0].mxu0 %v77
    %v545 = vpop.f32.mrb[0].mxu0
    %v546 = vadd.f32 0.0, %v545
    %v547 = vpop.f32.mrb[0].mxu0
    %548 = vmatprep.mubr.f32.mxu0 0.0
    %549 = vmatmul.mubr.f32.gmra.mrb[0].mxu0 %v78
    %v550 = vpop.f32.mrb[0].mxu0
    %v551 = vadd.f32 0.0, %v550
    %v552 = vpop.f32.mrb[0].mxu0
    %553 = vmatprep.mubr.f32.mxu0 0.0
    %554 = vmatmul.mubr.f32.gmra.mrb[0].mxu0 %v79
    %v555 = vpop.f32.mrb[0].mxu0
    %v556 = vadd.f32 0.0, %v555
    %v557 = vpop.f32.mrb[0].mxu0
    %558 = vmatprep.mubr.f32.mxu0 0.0
    %559 = vmatmul.mubr.f32.gmra.mrb[0].mxu0 %v80
    %v560 = vpop.f32.mrb[0].mxu0
    %v561 = vadd.f32 0.0, %v560
    %v562 = vpop.f32.mrb[0].mxu0
    %563 = vmatprep.mubr.f32.mxu0 0.0
    %564 = vmatmul.mubr.f32.gmra.mrb[0].mxu0 %v81
    %v565 = vpop.f32.mrb[0].mxu0
    %v566 = vadd.f32 0.0, %v565
    %v567 = vpop.f32.mrb[0].mxu0
    %568 = vmatprep.mubr.f32.mxu0 0.0
    %569 = vmatmul.mubr.f32.gmra.mrb[0].mxu0 %v82
    %v570 = vpop.f32.mrb[0].mxu0
    %v571 = vadd.f32 0.0, %v570
    %v572 = vpop.f32.mrb[0].mxu0
    %573 = vmatprep.mubr.f32.mxu0 0.0
    %574 = vmatmul.mubr.f32.gmra.mrb[0].mxu0 %v83
    %v575 = vpop.f32.mrb[0].mxu0
    %v576 = vadd.f32 0.0, %v575
    %v577 = vpop.f32.mrb[0].mxu0
    %578 = vmatprep.mubr.f32.mxu0 0.0
    %579 = vmatmul.mubr.f32.gmra.mrb[0].mxu0 %v84
    %v580 = vpop.f32.mrb[0].mxu0
    %v581 = vadd.f32 0.0, %v580
    %v582 = vpop.f32.mrb[0].mxu0
    %583 = vmatprep.mubr.f32.mxu0 0.0
    %584 = vmatmul.mubr.f32.gmra.mrb[0].mxu0 %v85
    %v585 = vpop.f32.mrb[0].mxu0
    %v586 = vadd.f32 0.0, %v585
    %v587 = vpop.f32.mrb[0].mxu0
    %588 = vmatprep.mubr.f32.mxu0 0.0
    %589 = vmatmul.mubr.f32.gmra.mrb[0].mxu0 %v86
    %v590 = vpop.f32.mrb[0].mxu0
    %v591 = vadd.f32 0.0, %v590
    %v592 = vpop.f32.mrb[0].mxu0
    %593 = vmatprep.mubr.f32.mxu0 0.0
    %594 = vmatmul.mubr.f32.gmra.mrb[0].mxu0 %v87
    %v595 = vpop.f32.mrb[0].mxu0
    %v596 = vadd.f32 0.0, %v595
    %v597 = vpop.f32.mrb[0].mxu0
    %598 = vmatprep.mubr.f32.mxu0 0.0
    %599 = vmatmul.mubr.f32.gmra.mrb[0].mxu0 %v88
    %v600 = vpop.f32.mrb[0].mxu0
    %v601 = vadd.f32 0.0, %v600
    %v602 = vpop.f32.mrb[0].mxu0
    %603 = vmatprep.mubr.f32.mxu0 0.0
    %604 = vmatmul.mubr.f32.gmra.mrb[0].mxu0 %v89
    %v605 = vpop.f32.mrb[0].mxu0
    %v606 = vadd.f32 0.0, %v605
    %v607 = vpop.f32.mrb[0].mxu0
    %608 = vmatprep.mubr.f32.mxu0 0.0
    %609 = vmatmul.mubr.f32.gmra.mrb[0].mxu0 %v90
    %v610 = vpop.f32.mrb[0].mxu0
    %v611 = vadd.f32 0.0, %v610
    %v612 = vpop.f32.mrb[0].mxu0
    %613 = vmatprep.mubr.f32.mxu0 0.0
    %614 = vmatmul.mubr.f32.gmra.mrb[0].mxu0 %v91
    %v615 = vpop.f32.mrb[0].mxu0
    %v616 = vadd.f32 0.0, %v615
    %v617 = vpop.f32.mrb[0].mxu0
    %618 = vmatprep.mubr.f32.mxu0 0.0
    %619 = vmatmul.mubr.f32.gmra.mrb[0].mxu0 %v92
    %v620 = vpop.f32.mrb[0].mxu0
    %v621 = vadd.f32 0.0, %v620
    %v622 = vpop.f32.mrb[0].mxu0
    %623 = vdwg.mxu0
    %624 = vst [vmem:[#allocation13] sm:$0xff] %v546
    %625 = vst [vmem:[#allocation13 + $0x8] sm:$0xff] %v551
    %626 = vst [vmem:[#allocation13 + $0x10] sm:$0xff] %v556
    %627 = vst [vmem:[#allocation13 + $0x18] sm:$0xff] %v561
    %628 = vst [vmem:[#allocation13 + $0x20] sm:$0xff] %v566
    %629 = vst [vmem:[#allocation13 + $0x28] sm:$0xff] %v571
    %630 = vst [vmem:[#allocation13 + $0x30] sm:$0xff] %v576
    %631 = vst [vmem:[#allocation13 + $0x38] sm:$0xff] %v581
    %632 = vst [vmem:[#allocation13 + $0x40] sm:$0xff] %v586
    %633 = vst [vmem:[#allocation13 + $0x48] sm:$0xff] %v591
    %634 = vst [vmem:[#allocation13 + $0x50] sm:$0xff] %v596
    %635 = vst [vmem:[#allocation13 + $0x58] sm:$0xff] %v601
    %636 = vst [vmem:[#allocation13 + $0x60] sm:$0xff] %v606
    %637 = vst [vmem:[#allocation13 + $0x68] sm:$0xff] %v611
    %638 = vst [vmem:[#allocation13 + $0x70] sm:$0xff] %v616
    %639 = vst [vmem:[#allocation13 + $0x78] sm:$0xff] %v621
    // Predicated region
    $region34: #{tpu_custom_call.1} parent=1 // pred_check
      _
    $region35: #{tpu_custom_call.1} parent=1 // pred_check_branch
      %641 = sbr.rel (0) target = $region37
    $region36: #{tpu_custom_call.1} parent=1 // pred_region
      %s643 = ssub.s32 2048, 2048
      %644 = vsyncadd [#allocation4], %s643
      %s645 = sshll.u32 [#allocation10], 4
      %s646 = int_to_ptr.vmem [resolvable:$true] %s645
      %651 = dma.vmem_to_hbm [thread:$0]  %s646, 2048, %s4, [#allocation4], 128, 128, 8
    $region37: #{tpu_custom_call.1} parent=1 // pred_fallthru
      _
    // Predicated region
    $region38: #{tpu_custom_call.1} parent=1 // pred_check
      _
    $region39: #{tpu_custom_call.1} parent=1 // pred_check_branch
      %653 = sbr.rel (0) target = $region41
    $region40: #{tpu_custom_call.1} parent=1 // pred_region
      %s655 = ssub.s32 2048, 2048
      %656 = vsyncadd [#allocation12], %s655
      %s657 = sshll.u32 [#allocation11], 4
      %s658 = int_to_ptr.vmem [resolvable:$true] %s657
      %663 = dma.vmem_to_hbm [thread:$0]  %s658, 2048, %s5, [#allocation12], 128, 128, 8
    $region41: #{tpu_custom_call.1} parent=1 // pred_fallthru
      _
    // Predicated region
    $region42: #{tpu_custom_call.1} parent=1 // pred_check
      _
    $region43: #{tpu_custom_call.1} parent=1 // pred_check_branch
      %665 = sbr.rel (0) target = $region45
    $region44: #{tpu_custom_call.1} parent=1 // pred_region
      %s667 = ssub.s32 2048, 2048
      %668 = vsyncadd [#allocation12], %s667
      %s669 = sshll.u32 [#allocation13], 4
      %s670 = int_to_ptr.vmem [resolvable:$true] %s669
      %675 = dma.vmem_to_hbm [thread:$0]  %s670, 2048, %s6, [#allocation12], 128, 128, 8
    $region45: #{tpu_custom_call.1} parent=1 // pred_fallthru
      _
    // Predicated region
    $region46: #{tpu_custom_call.1} parent=1 // pred_check
      _
    $region47: #{tpu_custom_call.1} parent=1 // pred_check_branch
      %677 = sbr.rel (0) target = $region49
    $region48: #{tpu_custom_call.1} parent=1 // pred_region
      %678 = dma.done [#allocation4], 2048
    $region49: #{tpu_custom_call.1} parent=1 // pred_fallthru
      _
    // Predicated region
    $region50: #{tpu_custom_call.1} parent=1 // pred_check
      _
    $region51: #{tpu_custom_call.1} parent=1 // pred_check_branch
      %680 = sbr.rel (0) target = $region53
    $region52: #{tpu_custom_call.1} parent=1 // pred_region
      %681 = dma.done [#allocation12], 2048
    $region53: #{tpu_custom_call.1} parent=1 // pred_fallthru
      _
    // Predicated region
    $region54: #{tpu_custom_call.1} parent=1 // pred_check
      _
    $region55: #{tpu_custom_call.1} parent=1 // pred_check_branch
      %683 = sbr.rel (0) target = $region57
    $region56: #{tpu_custom_call.1} parent=1 // pred_region
      %684 = dma.done [#allocation12], 2048
    $region57: #{tpu_custom_call.1} parent=1 // pred_fallthru
      _
    %685 = vsyncpa [#allocation3], 1
    %686 = vsyncpa [#allocation6], 1
    %687 = vsyncpa [#allocation9], 1
    %688 = vsyncpa [#allocation4], 1
    %689 = vsyncpa [#allocation12], 1

</llo_original>
